<compile_context>
chip_gen: v5e
topology: v5e:2x2
jax: 0.10.0
libtpu: 0.0.40
codegen_flags: <defaults>
</compile_context>

<pallas_src>
import jax
import jax.numpy as jnp
from jax.experimental import pallas as pl
from jax.experimental.pallas import tpu as pltpu

LANE = 128   # vreg lane width: minimum useful feature tile
ROW = 16     # row granularity: bf16 packs 16 rows per sublane tile


def _round_up(x, m):
    return (x + m - 1) // m * m


def mlp_kernel(x_ref, w1_ref, b1_ref, w2_ref, b2_ref, w3_ref, b3_ref, o_ref):
    # bf16 MXU operands, f32 accumulation, f32 epilogue (bias + ReLU).
    x = x_ref[...].astype(w1_ref.dtype)
    # Layer 1: Linear + ReLU (+ Dropout == identity in eval mode)
    h = jnp.dot(x, w1_ref[...], preferred_element_type=jnp.float32)
    h = jnp.maximum(h + b1_ref[...], 0.0)
    # Layer 2: Linear + ReLU (+ Dropout == identity in eval mode)
    h = jnp.dot(h.astype(w2_ref.dtype), w2_ref[...],
                preferred_element_type=jnp.float32)
    h = jnp.maximum(h + b2_ref[...], 0.0)
    # Output layer: Linear (no activation, no dropout)
    out = jnp.dot(h.astype(w3_ref.dtype), w3_ref[...],
                  preferred_element_type=jnp.float32)
    o_ref[...] = (out + b3_ref[...]).astype(o_ref.dtype)


def prepare_params(params, compute_dtype=jnp.bfloat16):
    """One-time prep: zero-pad every feature dim to 128 lanes and cast the
    weight matrices to the MXU compute dtype. Biases stay f32 (f32 epilogue).
    Padded rows/cols are exactly zero, so valid outputs are unchanged."""
    (w1, b1), (w2, b2), (w3, b3) = params
    d_in, h1 = w1.shape
    h2 = w2.shape[1]
    d_out = w3.shape[1]
    d_in_p, h1_p = _round_up(d_in, LANE), _round_up(h1, LANE)
    h2_p, d_out_p = _round_up(h2, LANE), _round_up(d_out, LANE)

    def padw(w, r, c):
        return jnp.pad(w, ((0, r - w.shape[0]), (0, c - w.shape[1]))
                       ).astype(compute_dtype)

    def padb(b, c):
        return jnp.pad(b, ((0, 0), (0, c - b.shape[1]))).astype(jnp.float32)

    return dict(
        w1=padw(w1, d_in_p, h1_p), b1=padb(b1, h1_p),
        w2=padw(w2, h1_p, h2_p), b2=padb(b2, h2_p),
        w3=padw(w3, h2_p, d_out_p), b3=padb(b3, d_out_p),
        d_in=d_in, d_out=d_out,
        d_in_p=d_in_p, h1_p=h1_p, h2_p=h2_p, d_out_p=d_out_p,
    )


def mlp_forward(x, prepared, *, tile_b=512, vmem_limit_bytes=None):
    """x: [B, input_size]; prepared: output of prepare_params()."""
    B, d_in = x.shape
    assert d_in == prepared["d_in"]
    d_out = prepared["d_out"]
    d_in_p, d_out_p = prepared["d_in_p"], prepared["d_out_p"]
    h1_p, h2_p = prepared["h1_p"], prepared["h2_p"]

    # --- Batch tiling: rounded to 16 rows (bf16 packing); clamp so the
    # "parallel" batch axis has >=2 steps whenever the batch allows (v7x 2 TC).
    B_r = _round_up(B, ROW)
    if B_r >= 2 * ROW:
        tile_b = min(tile_b, _round_up((B_r + 1) // 2, ROW))
    tile_b = max(ROW, _round_up(min(tile_b, B_r), ROW))
    B_p = _round_up(B, tile_b)
    xp = jnp.pad(x, ((0, B_p - B), (0, d_in_p - d_in))).astype(jnp.float32)

    # --- Explicit VMEM budget: resident weights/biases + double-buffered
    # x/out tiles + f32 intermediates. Capped at 64 MiB so it fits v7x too.
    resident_bytes = sum(
        prepared[k].size * prepared[k].dtype.itemsize
        for k in ("w1", "b1", "w2", "b2", "w3", "b3"))
    stream_bytes = 2 * tile_b * (d_in_p + d_out_p) * 4
    inter_bytes = 2 * tile_b * max(h1_p, h2_p) * 4
    budget = resident_bytes + stream_bytes + inter_bytes + (4 << 20)
    if vmem_limit_bytes is None:
        vmem_limit_bytes = min(max(budget, 32 << 20), 64 << 20)

    grid = (B_p // tile_b,)
    vmem = pltpu.MemorySpace.VMEM

    def resident(shape):
        # Constant block index across the grid -> weight/bias tile is DMA'd
        # once and stays VMEM-resident.
        return pl.BlockSpec(shape, lambda i: (0, 0), memory_space=vmem)

    out_padded = pl.pallas_call(
        mlp_kernel,
        out_shape=jax.ShapeDtypeStruct((B_p, d_out_p), x.dtype),
        grid=grid,
        in_specs=[
            pl.BlockSpec((tile_b, d_in_p), lambda i: (i, 0), memory_space=vmem),
            resident(prepared["w1"].shape), resident(prepared["b1"].shape),
            resident(prepared["w2"].shape), resident(prepared["b2"].shape),
            resident(prepared["w3"].shape), resident(prepared["b3"].shape),
        ],
        out_specs=pl.BlockSpec((tile_b, d_out_p), lambda i: (i, 0),
                               memory_space=vmem),
        compiler_params=pltpu.CompilerParams(
            dimension_semantics=("parallel",),
            vmem_limit_bytes=vmem_limit_bytes,
        ),
    )(xp, prepared["w1"], prepared["b1"], prepared["w2"], prepared["b2"],
      prepared["w3"], prepared["b3"])

    # Slice away batch padding and the padded output lanes (column 0.. real).
    return out_padded[:B, :d_out]


def init_params(key, sizes):
    """Deterministic init; sizes = [input_size, *hidden_sizes, output_size]."""
    params = []
    for i, (d_in, d_out) in enumerate(zip(sizes[:-1], sizes[1:])):
        kw, kb = jax.random.split(jax.random.fold_in(key, i))
        bound = 1.0 / jnp.sqrt(d_in)  # matches nn.Linear default uniform bound
        w = jax.random.uniform(kw, (d_in, d_out), jnp.float32, -bound, bound)
        b = jax.random.uniform(kb, (1, d_out), jnp.float32, -bound, bound)
        params.append((w, b))
    return params


if __name__ == "__main__":
    key = jax.random.PRNGKey(0)
    kx, kp = jax.random.split(key)

    # Shapes consistent with MLPModule(hidden_sizes=[64, 32], input_size=32,
    #                                  dropout_rate=0.1, output_size=1)
    batch = 8
    input_size = 32
    hidden_sizes = [64, 32]
    output_size = 1

    x = jax.random.normal(kx, (batch, input_size), jnp.float32)
    params = init_params(kp, [input_size] + hidden_sizes + [output_size])

    prepared = prepare_params(params)          # one-time pad + bf16 cast
    out = mlp_forward(x, prepared)
    out = jax.block_until_ready(out)

    # Reference 1: same bf16-operand / f32-accumulate path in plain JAX.
    h = x
    for li, (w, b) in enumerate(params):
        h = jnp.dot(h.astype(jnp.bfloat16), w.astype(jnp.bfloat16),
                    preferred_element_type=jnp.float32) + b
        if li < len(params) - 1:
            h = jnp.maximum(h, 0.0)
    ref_bf16 = h

    # Reference 2: full-f32 reference (looser tolerance; bf16 operand rounding).
    h = x
    for li, (w, b) in enumerate(params):
        h = h @ w + b
        if li < len(params) - 1:
            h = jnp.maximum(h, 0.0)
    ref_f32 = h

    assert out.shape == (batch, output_size)
    assert jnp.allclose(out, ref_bf16, atol=2e-3, rtol=2e-3)
    assert jnp.allclose(out, ref_f32, atol=3e-2, rtol=3e-2)

    print("KERNEL_OK")
</pallas_src>

<mosaic_0001>
module attributes {stable_mosaic.version = 11 : i64} {
  func.func @mlp_kernel(%arg0: i32, %arg1: memref<16x128xf32, #tpu.memory_space<vmem>>, %arg2: memref<128x128xbf16, #tpu.memory_space<vmem>>, %arg3: memref<1x128xf32, #tpu.memory_space<vmem>>, %arg4: memref<128x128xbf16, #tpu.memory_space<vmem>>, %arg5: memref<1x128xf32, #tpu.memory_space<vmem>>, %arg6: memref<128x128xbf16, #tpu.memory_space<vmem>>, %arg7: memref<1x128xf32, #tpu.memory_space<vmem>>, %arg8: memref<16x128xf32, #tpu.memory_space<vmem>>) attributes {dimension_semantics = [#tpu.dimension_semantics<parallel>], iteration_bounds = array<i64: 1>, scalar_prefetch = 0 : i64, scratch_operands = 0 : i64, tpu.core_type = #tpu.core_type<tc>, window_params = [{transform_indices = @transform_0, window_bounds = array<i64: 16, 128>}, {pipeline_mode = #tpu.pipeline_mode<synchronous>, transform_indices = @transform_1, window_bounds = array<i64: 128, 128>}, {pipeline_mode = #tpu.pipeline_mode<synchronous>, transform_indices = @transform_2, window_bounds = array<i64: 1, 128>}, {pipeline_mode = #tpu.pipeline_mode<synchronous>, transform_indices = @transform_3, window_bounds = array<i64: 128, 128>}, {pipeline_mode = #tpu.pipeline_mode<synchronous>, transform_indices = @transform_4, window_bounds = array<i64: 1, 128>}, {pipeline_mode = #tpu.pipeline_mode<synchronous>, transform_indices = @transform_5, window_bounds = array<i64: 128, 128>}, {pipeline_mode = #tpu.pipeline_mode<synchronous>, transform_indices = @transform_6, window_bounds = array<i64: 1, 128>}, {transform_indices = @transform_7, window_bounds = array<i64: 16, 128>}]} {
    %c0 = arith.constant 0 : index
    %c0_0 = arith.constant 0 : index
    %0 = vector.load %arg1[%c0, %c0_0] : memref<16x128xf32, #tpu.memory_space<vmem>>, vector<16x128xf32>
    %1 = arith.truncf %0 : vector<16x128xf32> to vector<16x128xbf16>
    %c0_1 = arith.constant 0 : index
    %c0_2 = arith.constant 0 : index
    %2 = vector.load %arg2[%c0_1, %c0_2] : memref<128x128xbf16, #tpu.memory_space<vmem>>, vector<128x128xbf16>
    %cst = arith.constant dense<0.000000e+00> : vector<16x128xf32>
    %3 = tpu.matmul %1, %2, %cst {dimension_numbers = #tpu.dot_dimension_numbers<[1], [0], [0], [1], [0, 0, 1, 1], [], []>} : vector<16x128xbf16>, vector<128x128xbf16>, vector<16x128xf32> -> vector<16x128xf32>
    %c0_3 = arith.constant 0 : index
    %c0_4 = arith.constant 0 : index
    %4 = vector.load %arg3[%c0_3, %c0_4] : memref<1x128xf32, #tpu.memory_space<vmem>>, vector<1x128xf32>
    %5 = vector.broadcast %4 : vector<1x128xf32> to vector<16x128xf32>
    %6 = arith.addf %3, %5 : vector<16x128xf32>
    %cst_5 = arith.constant 0.000000e+00 : f32
    %7 = vector.broadcast %cst_5 : f32 to vector<16x128xf32>
    %8 = arith.maximumf %6, %7 : vector<16x128xf32>
    %9 = arith.truncf %8 : vector<16x128xf32> to vector<16x128xbf16>
    %c0_6 = arith.constant 0 : index
    %c0_7 = arith.constant 0 : index
    %10 = vector.load %arg4[%c0_6, %c0_7] : memref<128x128xbf16, #tpu.memory_space<vmem>>, vector<128x128xbf16>
    %cst_8 = arith.constant dense<0.000000e+00> : vector<16x128xf32>
    %11 = tpu.matmul %9, %10, %cst_8 {dimension_numbers = #tpu.dot_dimension_numbers<[1], [0], [0], [1], [0, 0, 1, 1], [], []>} : vector<16x128xbf16>, vector<128x128xbf16>, vector<16x128xf32> -> vector<16x128xf32>
    %c0_9 = arith.constant 0 : index
    %c0_10 = arith.constant 0 : index
    %12 = vector.load %arg5[%c0_9, %c0_10] : memref<1x128xf32, #tpu.memory_space<vmem>>, vector<1x128xf32>
    %13 = vector.broadcast %12 : vector<1x128xf32> to vector<16x128xf32>
    %14 = arith.addf %11, %13 : vector<16x128xf32>
    %cst_11 = arith.constant 0.000000e+00 : f32
    %15 = vector.broadcast %cst_11 : f32 to vector<16x128xf32>
    %16 = arith.maximumf %14, %15 : vector<16x128xf32>
    %17 = arith.truncf %16 : vector<16x128xf32> to vector<16x128xbf16>
    %c0_12 = arith.constant 0 : index
    %c0_13 = arith.constant 0 : index
    %18 = vector.load %arg6[%c0_12, %c0_13] : memref<128x128xbf16, #tpu.memory_space<vmem>>, vector<128x128xbf16>
    %cst_14 = arith.constant dense<0.000000e+00> : vector<16x128xf32>
    %19 = tpu.matmul %17, %18, %cst_14 {dimension_numbers = #tpu.dot_dimension_numbers<[1], [0], [0], [1], [0, 0, 1, 1], [], []>} : vector<16x128xbf16>, vector<128x128xbf16>, vector<16x128xf32> -> vector<16x128xf32>
    %c0_15 = arith.constant 0 : index
    %c0_16 = arith.constant 0 : index
    %20 = vector.load %arg7[%c0_15, %c0_16] : memref<1x128xf32, #tpu.memory_space<vmem>>, vector<1x128xf32>
    %21 = vector.broadcast %20 : vector<1x128xf32> to vector<16x128xf32>
    %22 = arith.addf %19, %21 : vector<16x128xf32>
    %c0_17 = arith.constant 0 : index
    %c0_18 = arith.constant 0 : index
    %23 = vector.load %arg8[%c0_17, %c0_18] : memref<16x128xf32, #tpu.memory_space<vmem>>, vector<16x128xf32>
    tpu.vector_store %arg8[%c0_17, %c0_18], %22 {strides = array<i32>} : memref<16x128xf32, #tpu.memory_space<vmem>>, vector<16x128xf32>,
    return
  }
  func.func @transform_0(%arg0: i32) -> (i32, i32) {
    %c0_i32 = arith.constant 0 : i32
    %c0_i32_0 = arith.constant 0 : i32
    return %arg0, %c0_i32 : i32, i32
  }
  func.func @transform_1(%arg0: i32) -> (i32, i32) {
    %c0_i32 = arith.constant 0 : i32
    %c0_i32_0 = arith.constant 0 : i32
    %c0_i32_1 = arith.constant 0 : i32
    return %c0_i32, %c0_i32_0 : i32, i32
  }
  func.func @transform_2(%arg0: i32) -> (i32, i32) {
    %c0_i32 = arith.constant 0 : i32
    %c0_i32_0 = arith.constant 0 : i32
    %c0_i32_1 = arith.constant 0 : i32
    return %c0_i32, %c0_i32_0 : i32, i32
  }
  func.func @transform_3(%arg0: i32) -> (i32, i32) {
    %c0_i32 = arith.constant 0 : i32
    %c0_i32_0 = arith.constant 0 : i32
    %c0_i32_1 = arith.constant 0 : i32
    return %c0_i32, %c0_i32_0 : i32, i32
  }
  func.func @transform_4(%arg0: i32) -> (i32, i32) {
    %c0_i32 = arith.constant 0 : i32
    %c0_i32_0 = arith.constant 0 : i32
    %c0_i32_1 = arith.constant 0 : i32
    return %c0_i32, %c0_i32_0 : i32, i32
  }
  func.func @transform_5(%arg0: i32) -> (i32, i32) {
    %c0_i32 = arith.constant 0 : i32
    %c0_i32_0 = arith.constant 0 : i32
    %c0_i32_1 = arith.constant 0 : i32
    return %c0_i32, %c0_i32_0 : i32, i32
  }
  func.func @transform_6(%arg0: i32) -> (i32, i32) {
    %c0_i32 = arith.constant 0 : i32
    %c0_i32_0 = arith.constant 0 : i32
    %c0_i32_1 = arith.constant 0 : i32
    return %c0_i32, %c0_i32_0 : i32, i32
  }
  func.func @transform_7(%arg0: i32) -> (i32, i32) {
    %c0_i32 = arith.constant 0 : i32
    %c0_i32_0 = arith.constant 0 : i32
    return %arg0, %c0_i32 : i32, i32
  }
}

</mosaic_0001>

<llo_original>
// kernel: tpu_custom_call.1
$region0: #{tpu_custom_call.1}
  #allocation0 [shape = 'u32[]', space=smem, size = 0x4, offset = 0x4, fixed_abs, tag = 'smem constant byte address 0x4 - core index']
  #allocation1 [shape = 'u32[72,128]{1,0:T(1,128)}', space=vmem, size = 0x9000, scoped, tag = 'internal scratch']
  %s0 = inlined_call_operand.hbm [shape: f32[16,128], index: 0, kind: input, shape index: {}]
  %s1 = inlined_call_operand.hbm [shape: bf16[128,128], index: 1, kind: input, shape index: {}]
  %s2 = inlined_call_operand.vmem [shape: f32[1,128], index: 2, kind: input, shape index: {}]
  %s3 = inlined_call_operand.hbm [shape: bf16[128,128], index: 3, kind: input, shape index: {}]
  %s4 = inlined_call_operand.vmem [shape: f32[1,128], index: 4, kind: input, shape index: {}]
  %s5 = inlined_call_operand.hbm [shape: bf16[128,128], index: 5, kind: input, shape index: {}]
  %s6 = inlined_call_operand.vmem [shape: f32[1,128], index: 6, kind: input, shape index: {}]
  %s7 = inlined_call_operand.hbm [shape: f32[16,128], index: 7, kind: output, shape index: {}]
  %s8 = sld [smem:[#allocation0]]
  $region54: #{tpu_custom_call.1} parent=0
    _
  %s10 = ssub.s32 1, %s8
  %s11 = scalar_select 0, %s10, %s8
  $region1: #{tpu_custom_call.1} parent=0
    #allocation2 [shape = 'u8[8192]{0}', space=vmem, size = 0x2000, scoped, tag = 'input window, operand 0, single buffered']
    #allocation3 [shape = 's32[1]{0}', space=sflag, size = 0x4, scoped, tag = 'scoped memory for tpu_custom_call.1']
    #allocation4 [shape = 's32[1]{0}', space=sflag, size = 0x4, scoped, tag = 'scoped memory for tpu_custom_call.1']
    #allocation5 [shape = 'u8[32768]{0}', space=vmem, size = 0x8000, scoped, tag = 'input window, operand 1, single buffered']
    #allocation6 [shape = 's32[1]{0}', space=sflag, size = 0x4, scoped, tag = 'scoped memory for tpu_custom_call.1']
    #allocation7 [shape = 'u8[32768]{0}', space=vmem, size = 0x8000, scoped, tag = 'input window, operand 3, single buffered']
    #allocation8 [shape = 'u8[32768]{0}', space=vmem, size = 0x8000, scoped, tag = 'input window, operand 5, single buffered']
    #allocation9 [shape = 's32[1]{0}', space=sflag, size = 0x4, scoped, tag = 'scoped memory for tpu_custom_call.1']
    #allocation10 [shape = 'u8[8192]{0}', space=vmem, size = 0x2000, scoped, tag = 'output window, operand 0, single buffered']
    %12 = vsyncpa [#allocation3], 0
    %13 = vsyncpa [#allocation6], 0
    %14 = vsyncpa [#allocation9], 0
    %15 = vsyncpa [#allocation4], 0
    // Predicated region
    $region2: #{tpu_custom_call.1} parent=1 // pred_check
      _
    $region3: #{tpu_custom_call.1} parent=1 // pred_check_branch
      %17 = sbr.rel (0) target = $region5
    $region4: #{tpu_custom_call.1} parent=1 // pred_region
      %19 = vsyncadd [#allocation3], 0
      %s20 = sshll.u32 %s0, 4
      %s21 = int_to_ptr.hbm [resolvable:$true] %s20
      %s22 = sshll.u32 [#allocation2], 4
      %s23 = int_to_ptr.vmem [resolvable:$true] %s22
      %28 = dma.hbm_to_vmem [thread:$0]  %s21, 256, %s23, [#allocation3], 128, 128, 8
    $region5: #{tpu_custom_call.1} parent=1 // pred_fallthru
      _
    // Predicated region
    $region6: #{tpu_custom_call.1} parent=1 // pred_check
      _
    $region7: #{tpu_custom_call.1} parent=1 // pred_check_branch
      %30 = sbr.rel (0) target = $region9
    $region8: #{tpu_custom_call.1} parent=1 // pred_region
      %32 = vsyncadd [#allocation6], 0
      %s33 = sshll.u32 %s1, 4
      %s34 = int_to_ptr.hbm [resolvable:$true] %s33
      %s35 = sshll.u32 [#allocation5], 4
      %s36 = int_to_ptr.vmem [resolvable:$true] %s35
      %41 = dma.hbm_to_vmem [thread:$0]  %s34, 1024, %s36, [#allocation6], 64, 64, 4
    $region9: #{tpu_custom_call.1} parent=1 // pred_fallthru
      _
    // Predicated region
    $region10: #{tpu_custom_call.1} parent=1 // pred_check
      _
    $region11: #{tpu_custom_call.1} parent=1 // pred_check_branch
      %43 = sbr.rel (0) target = $region13
    $region12: #{tpu_custom_call.1} parent=1 // pred_region
      _
    $region13: #{tpu_custom_call.1} parent=1 // pred_fallthru
      _
    // Predicated region
    $region14: #{tpu_custom_call.1} parent=1 // pred_check
      _
    $region15: #{tpu_custom_call.1} parent=1 // pred_check_branch
      %45 = sbr.rel (0) target = $region17
    $region16: #{tpu_custom_call.1} parent=1 // pred_region
      %47 = vsyncadd [#allocation6], 0
      %s48 = sshll.u32 %s3, 4
      %s49 = int_to_ptr.hbm [resolvable:$true] %s48
      %s50 = sshll.u32 [#allocation7], 4
      %s51 = int_to_ptr.vmem [resolvable:$true] %s50
      %56 = dma.hbm_to_vmem [thread:$0]  %s49, 1024, %s51, [#allocation6], 64, 64, 4
    $region17: #{tpu_custom_call.1} parent=1 // pred_fallthru
      _
    // Predicated region
    $region18: #{tpu_custom_call.1} parent=1 // pred_check
      _
    $region19: #{tpu_custom_call.1} parent=1 // pred_check_branch
      %58 = sbr.rel (0) target = $region21
    $region20: #{tpu_custom_call.1} parent=1 // pred_region
      _
    $region21: #{tpu_custom_call.1} parent=1 // pred_fallthru
      _
    // Predicated region
    $region22: #{tpu_custom_call.1} parent=1 // pred_check
      _
    $region23: #{tpu_custom_call.1} parent=1 // pred_check_branch
      %60 = sbr.rel (0) target = $region25
    $region24: #{tpu_custom_call.1} parent=1 // pred_region
      %62 = vsyncadd [#allocation9], 0
      %s63 = sshll.u32 %s5, 4
      %s64 = int_to_ptr.hbm [resolvable:$true] %s63
      %s65 = sshll.u32 [#allocation8], 4
      %s66 = int_to_ptr.vmem [resolvable:$true] %s65
      %71 = dma.hbm_to_vmem [thread:$0]  %s64, 1024, %s66, [#allocation9], 64, 64, 4
    $region25: #{tpu_custom_call.1} parent=1 // pred_fallthru
      _
    // Predicated region
    $region26: #{tpu_custom_call.1} parent=1 // pred_check
      _
    $region27: #{tpu_custom_call.1} parent=1 // pred_check_branch
      %73 = sbr.rel (0) target = $region29
    $region28: #{tpu_custom_call.1} parent=1 // pred_region
      _
    $region29: #{tpu_custom_call.1} parent=1 // pred_fallthru
      _
    // Predicated region
    $region30: #{tpu_custom_call.1} parent=1 // pred_check
      _
    $region31: #{tpu_custom_call.1} parent=1 // pred_check_branch
      %75 = sbr.rel (0) target = $region33
    $region32: #{tpu_custom_call.1} parent=1 // pred_region
      %77 = dma.done [#allocation3], 256
    $region33: #{tpu_custom_call.1} parent=1 // pred_fallthru
      _
    // Predicated region
    $region34: #{tpu_custom_call.1} parent=1 // pred_check
      _
    $region35: #{tpu_custom_call.1} parent=1 // pred_check_branch
      %79 = sbr.rel (0) target = $region37
    $region36: #{tpu_custom_call.1} parent=1 // pred_region
      %81 = dma.done [#allocation6], 1024
    $region37: #{tpu_custom_call.1} parent=1 // pred_fallthru
      _
    // Predicated region
    $region38: #{tpu_custom_call.1} parent=1 // pred_check
      _
    $region39: #{tpu_custom_call.1} parent=1 // pred_check_branch
      %83 = sbr.rel (0) target = $region41
    $region40: #{tpu_custom_call.1} parent=1 // pred_region
      %85 = dma.done [#allocation6], 1024
    $region41: #{tpu_custom_call.1} parent=1 // pred_fallthru
      _
    // Predicated region
    $region42: #{tpu_custom_call.1} parent=1 // pred_check
      _
    $region43: #{tpu_custom_call.1} parent=1 // pred_check_branch
      %87 = sbr.rel (0) target = $region45
    $region44: #{tpu_custom_call.1} parent=1 // pred_region
      %89 = dma.done [#allocation9], 1024
    $region45: #{tpu_custom_call.1} parent=1 // pred_fallthru
      _
    %v90 = vld [vmem:[#allocation2] sm:$0xff]
    %v91 = vld [vmem:[#allocation2 + $0x8] sm:$0xff]
    %v92 = vpack.c.bf16 %v91, %v90
    %v93 = vld [vmem:[#allocation5] sm:$0xf]
    %v94 = vld [vmem:[#allocation5 + $0x4] sm:$0xf]
    %v95 = vld [vmem:[#allocation5 + $0x8] sm:$0xf]
    %v96 = vld [vmem:[#allocation5 + $0xc] sm:$0xf]
    %v97 = vld [vmem:[#allocation5 + $0x10] sm:$0xf]
    %v98 = vld [vmem:[#allocation5 + $0x14] sm:$0xf]
    %v99 = vld [vmem:[#allocation5 + $0x18] sm:$0xf]
    %v100 = vld [vmem:[#allocation5 + $0x1c] sm:$0xf]
    %v101 = vld [vmem:[#allocation5 + $0x20] sm:$0xf]
    %v102 = vld [vmem:[#allocation5 + $0x24] sm:$0xf]
    %v103 = vld [vmem:[#allocation5 + $0x28] sm:$0xf]
    %v104 = vld [vmem:[#allocation5 + $0x2c] sm:$0xf]
    %v105 = vld [vmem:[#allocation5 + $0x30] sm:$0xf]
    %v106 = vld [vmem:[#allocation5 + $0x34] sm:$0xf]
    %v107 = vld [vmem:[#allocation5 + $0x38] sm:$0xf]
    %v108 = vld [vmem:[#allocation5 + $0x3c] sm:$0xf]
    %v109 = vld [vmem:[%s2] sm:$0x1]
    %v111 = vperm.slane %v109, 0
    %v129 = vunpack.c.l.b16 %v93
    %v130 = vunpack.c.l.b16 %v94
    %v131 = vunpack.c.l.b16 %v95
    %v132 = vunpack.c.l.b16 %v96
    %v133 = vunpack.c.l.b16 %v97
    %v134 = vunpack.c.l.b16 %v98
    %v135 = vunpack.c.l.b16 %v99
    %v136 = vunpack.c.l.b16 %v100
    %v137 = vunpack.c.l.b16 %v101
    %v138 = vunpack.c.l.b16 %v102
    %v139 = vunpack.c.l.b16 %v103
    %v140 = vunpack.c.l.b16 %v104
    %v141 = vunpack.c.l.b16 %v105
    %v142 = vunpack.c.l.b16 %v106
    %v143 = vunpack.c.l.b16 %v107
    %v144 = vunpack.c.l.b16 %v108
    %v145 = vpack.c.b16 %v130, %v129
    %v146 = vpack.c.b16 %v132, %v131
    %v147 = vpack.c.b16 %v134, %v133
    %v148 = vpack.c.b16 %v136, %v135
    %v149 = vpack.c.b16 %v138, %v137
    %v150 = vpack.c.b16 %v140, %v139
    %v151 = vpack.c.b16 %v142, %v141
    %v152 = vpack.c.b16 %v144, %v143
    %161 = vmatpush.bf16.msra.mxu0 %v152
    %162 = vmatpush.bf16.msra.mxu0 %v151
    %163 = vmatpush.bf16.msra.mxu0 %v150
    %164 = vmatpush.bf16.msra.mxu0 %v149
    %165 = vmatpush.bf16.msra.mxu0 %v148
    %166 = vmatpush.bf16.msra.mxu0 %v147
    %167 = vmatpush.bf16.msra.mxu0 %v146
    %168 = vmatpush.bf16.msra.mxu0 %v145
    %169 = vmatmul.bf16.gmra.mxu0 %v92
    %v170 = vpop.f32.mrf.mxu0
    %v171 = vadd.f32 %v111, %v170
    %v172 = vpop.f32.mrf.mxu0
    %v173 = vadd.f32 %v111, %v172
    %174 = vdwg.mxu0
    %v175 = vmax.f32 %v171, 0.0
    %v176 = vmax.f32 %v173, 0.0
    %v177 = vpack.c.bf16 %v176, %v175
    %v178 = vld [vmem:[#allocation7] sm:$0xf]
    %v179 = vld [vmem:[#allocation7 + $0x4] sm:$0xf]
    %v180 = vld [vmem:[#allocation7 + $0x8] sm:$0xf]
    %v181 = vld [vmem:[#allocation7 + $0xc] sm:$0xf]
    %v182 = vld [vmem:[#allocation7 + $0x10] sm:$0xf]
    %v183 = vld [vmem:[#allocation7 + $0x14] sm:$0xf]
    %v184 = vld [vmem:[#allocation7 + $0x18] sm:$0xf]
    %v185 = vld [vmem:[#allocation7 + $0x1c] sm:$0xf]
    %v186 = vld [vmem:[#allocation7 + $0x20] sm:$0xf]
    %v187 = vld [vmem:[#allocation7 + $0x24] sm:$0xf]
    %v188 = vld [vmem:[#allocation7 + $0x28] sm:$0xf]
    %v189 = vld [vmem:[#allocation7 + $0x2c] sm:$0xf]
    %v190 = vld [vmem:[#allocation7 + $0x30] sm:$0xf]
    %v191 = vld [vmem:[#allocation7 + $0x34] sm:$0xf]
    %v192 = vld [vmem:[#allocation7 + $0x38] sm:$0xf]
    %v193 = vld [vmem:[#allocation7 + $0x3c] sm:$0xf]
    %v194 = vld [vmem:[%s4] sm:$0x1]
    %v196 = vperm.slane %v194, 0
    %v214 = vunpack.c.l.b16 %v178
    %v215 = vunpack.c.l.b16 %v179
    %v216 = vunpack.c.l.b16 %v180
    %v217 = vunpack.c.l.b16 %v181
    %v218 = vunpack.c.l.b16 %v182
    %v219 = vunpack.c.l.b16 %v183
    %v220 = vunpack.c.l.b16 %v184
    %v221 = vunpack.c.l.b16 %v185
    %v222 = vunpack.c.l.b16 %v186
    %v223 = vunpack.c.l.b16 %v187
    %v224 = vunpack.c.l.b16 %v188
    %v225 = vunpack.c.l.b16 %v189
    %v226 = vunpack.c.l.b16 %v190
    %v227 = vunpack.c.l.b16 %v191
    %v228 = vunpack.c.l.b16 %v192
    %v229 = vunpack.c.l.b16 %v193
    %v230 = vpack.c.b16 %v215, %v214
    %v231 = vpack.c.b16 %v217, %v216
    %v232 = vpack.c.b16 %v219, %v218
    %v233 = vpack.c.b16 %v221, %v220
    %v234 = vpack.c.b16 %v223, %v222
    %v235 = vpack.c.b16 %v225, %v224
    %v236 = vpack.c.b16 %v227, %v226
    %v237 = vpack.c.b16 %v229, %v228
    %246 = vmatpush.bf16.msra.mxu0 %v237
    %247 = vmatpush.bf16.msra.mxu0 %v236
    %248 = vmatpush.bf16.msra.mxu0 %v235
    %249 = vmatpush.bf16.msra.mxu0 %v234
    %250 = vmatpush.bf16.msra.mxu0 %v233
    %251 = vmatpush.bf16.msra.mxu0 %v232
    %252 = vmatpush.bf16.msra.mxu0 %v231
    %253 = vmatpush.bf16.msra.mxu0 %v230
    %254 = vmatmul.bf16.gmra.mxu0 %v177
    %v255 = vpop.f32.mrf.mxu0
    %v256 = vadd.f32 %v196, %v255
    %v257 = vpop.f32.mrf.mxu0
    %v258 = vadd.f32 %v196, %v257
    %259 = vdwg.mxu0
    %v260 = vmax.f32 %v256, 0.0
    %v261 = vmax.f32 %v258, 0.0
    %v262 = vpack.c.bf16 %v261, %v260
    %v263 = vld [vmem:[#allocation8] sm:$0xf]
    %v264 = vld [vmem:[#allocation8 + $0x4] sm:$0xf]
    %v265 = vld [vmem:[#allocation8 + $0x8] sm:$0xf]
    %v266 = vld [vmem:[#allocation8 + $0xc] sm:$0xf]
    %v267 = vld [vmem:[#allocation8 + $0x10] sm:$0xf]
    %v268 = vld [vmem:[#allocation8 + $0x14] sm:$0xf]
    %v269 = vld [vmem:[#allocation8 + $0x18] sm:$0xf]
    %v270 = vld [vmem:[#allocation8 + $0x1c] sm:$0xf]
    %v271 = vld [vmem:[#allocation8 + $0x20] sm:$0xf]
    %v272 = vld [vmem:[#allocation8 + $0x24] sm:$0xf]
    %v273 = vld [vmem:[#allocation8 + $0x28] sm:$0xf]
    %v274 = vld [vmem:[#allocation8 + $0x2c] sm:$0xf]
    %v275 = vld [vmem:[#allocation8 + $0x30] sm:$0xf]
    %v276 = vld [vmem:[#allocation8 + $0x34] sm:$0xf]
    %v277 = vld [vmem:[#allocation8 + $0x38] sm:$0xf]
    %v278 = vld [vmem:[#allocation8 + $0x3c] sm:$0xf]
    %v279 = vld [vmem:[%s6] sm:$0x1]
    %v281 = vperm.slane %v279, 0
    %v299 = vunpack.c.l.b16 %v263
    %v300 = vunpack.c.l.b16 %v264
    %v301 = vunpack.c.l.b16 %v265
    %v302 = vunpack.c.l.b16 %v266
    %v303 = vunpack.c.l.b16 %v267
    %v304 = vunpack.c.l.b16 %v268
    %v305 = vunpack.c.l.b16 %v269
    %v306 = vunpack.c.l.b16 %v270
    %v307 = vunpack.c.l.b16 %v271
    %v308 = vunpack.c.l.b16 %v272
    %v309 = vunpack.c.l.b16 %v273
    %v310 = vunpack.c.l.b16 %v274
    %v311 = vunpack.c.l.b16 %v275
    %v312 = vunpack.c.l.b16 %v276
    %v313 = vunpack.c.l.b16 %v277
    %v314 = vunpack.c.l.b16 %v278
    %v315 = vpack.c.b16 %v300, %v299
    %v316 = vpack.c.b16 %v302, %v301
    %v317 = vpack.c.b16 %v304, %v303
    %v318 = vpack.c.b16 %v306, %v305
    %v319 = vpack.c.b16 %v308, %v307
    %v320 = vpack.c.b16 %v310, %v309
    %v321 = vpack.c.b16 %v312, %v311
    %v322 = vpack.c.b16 %v314, %v313
    %331 = vmatpush.bf16.msra.mxu0 %v322
    %332 = vmatpush.bf16.msra.mxu0 %v321
    %333 = vmatpush.bf16.msra.mxu0 %v320
    %334 = vmatpush.bf16.msra.mxu0 %v319
    %335 = vmatpush.bf16.msra.mxu0 %v318
    %336 = vmatpush.bf16.msra.mxu0 %v317
    %337 = vmatpush.bf16.msra.mxu0 %v316
    %338 = vmatpush.bf16.msra.mxu0 %v315
    %339 = vmatmul.bf16.gmra.mxu0 %v262
    %v340 = vpop.f32.mrf.mxu0
    %v341 = vadd.f32 %v281, %v340
    %v342 = vpop.f32.mrf.mxu0
    %v343 = vadd.f32 %v281, %v342
    %344 = vdwg.mxu0
    %345 = vst [vmem:[#allocation10] sm:$0xff] %v341
    %346 = vst [vmem:[#allocation10 + $0x8] sm:$0xff] %v343
    // Predicated region
    $region46: #{tpu_custom_call.1} parent=1 // pred_check
      _
    $region47: #{tpu_custom_call.1} parent=1 // pred_check_branch
      %348 = sbr.rel (0) target = $region49
    $region48: #{tpu_custom_call.1} parent=1 // pred_region
      %350 = vsyncadd [#allocation4], 0
      %s351 = sshll.u32 [#allocation10], 4
      %s352 = int_to_ptr.vmem [resolvable:$true] %s351
      %s353 = sshll.u32 %s7, 4
      %s354 = int_to_ptr.hbm [resolvable:$true] %s353
      %359 = dma.vmem_to_hbm [thread:$0]  %s352, 256, %s354, [#allocation4], 128, 128, 8
    $region49: #{tpu_custom_call.1} parent=1 // pred_fallthru
      _
    // Predicated region
    $region50: #{tpu_custom_call.1} parent=1 // pred_check
      _
    $region51: #{tpu_custom_call.1} parent=1 // pred_check_branch
      %361 = sbr.rel (0) target = $region53
    $region52: #{tpu_custom_call.1} parent=1 // pred_region
      %363 = dma.done [#allocation4], 256
    $region53: #{tpu_custom_call.1} parent=1 // pred_fallthru
      _
    %364 = vsyncpa [#allocation3], 1
    %365 = vsyncpa [#allocation6], 1
    %366 = vsyncpa [#allocation9], 1
    %367 = vsyncpa [#allocation4], 1

</llo_original>
